<compile_context>
chip_gen: v6e
topology: v6e:2x2x1
jax: 0.10.0
libtpu: 0.0.40
codegen_flags: <defaults>
</compile_context>

<pallas_src>
import jax
import jax.numpy as jnp
from jax.experimental import pallas as pl
from jax.experimental.pallas import tpu as pltpu

D_IN = 1024
D_HID = 64
D_OUT = 36
D_HID_PAD = 128   # lane-dense hidden width (free on the MXU)
D_OUT_PAD = 128   # lane-dense output width -> unmasked stores
TM_MAX = 2048     # max batch-tile rows (~18 MiB resident with f32 x)


def _round_up(x, m):
    return (x + m - 1) // m * m


def _mlp_kernel(x_ref, w1_ref, b1_ref, w2_ref, b2_ref, o_ref):
    # bf16 cast in-kernel (no-op if the producer already supplies bf16);
    # first matmul on the MXU with f32 accumulation.
    x = x_ref[...].astype(jnp.bfloat16)
    h = jnp.dot(x, w1_ref[...], preferred_element_type=jnp.float32)
    h = jax.nn.sigmoid(h + b1_ref[...])          # exp + recip on the EUP slot
    # Second matmul fully in f32 (tiny K=128) -- no second rounding of the
    # activations.  Padded hidden columns contribute 0.5 * 0 = 0: exact.
    out = jnp.dot(h, w2_ref[...], preferred_element_type=jnp.float32)
    o_ref[...] = (out + b2_ref[...]).astype(o_ref.dtype)


def prepare_params(w1, b1, w2, b2):
    """Pad + cast the call-invariant weights ONCE (do this at model init)."""
    w1_p = jnp.zeros((D_IN, D_HID_PAD), jnp.bfloat16).at[:, :D_HID].set(
        w1.astype(jnp.bfloat16))
    b1_p = jnp.zeros((1, D_HID_PAD), jnp.float32).at[0, :D_HID].set(
        b1.reshape(-1).astype(jnp.float32))
    w2_p = jnp.zeros((D_HID_PAD, D_OUT_PAD), jnp.float32).at[:D_HID, :D_OUT].set(
        w2.astype(jnp.float32))
    b2_p = jnp.zeros((1, D_OUT_PAD), jnp.float32).at[0, :D_OUT].set(
        b2.reshape(-1).astype(jnp.float32))
    return w1_p, b1_p, w2_p, b2_p


def _pick_tm(B):
    """Balanced 8-aligned batch tile: >=2 grid steps when possible, minimal
    dead rows, capped at TM_MAX."""
    if B <= 8:
        return B                               # single full-extent tile
    n_tiles = max(2, pl.cdiv(B, TM_MAX))       # >=2 steps so both v7x TCs work
    tm = _round_up(pl.cdiv(B, n_tiles), 8)
    return min(tm, TM_MAX)


def handwritten_detection_forward(x, params, *, tm=None):
    """x: (B, 1024) f32 (or bf16).  params: output of prepare_params.

    Returns (B, 36) f32 == sigmoid(x @ w1 + b1) @ w2 + b2.
    """
    w1_p, b1_p, w2_p, b2_p = params
    B = x.shape[0]
    if tm is None:
        tm = _pick_tm(B)

    grid = (pl.cdiv(B, tm),)                       # ragged last tile is masked
    resident = dict(pipeline_mode=pl.Buffered(1))  # constant-index operands

    out_padded = pl.pallas_call(
        _mlp_kernel,
        out_shape=jax.ShapeDtypeStruct((B, D_OUT_PAD), jnp.float32),
        grid_spec=pltpu.PrefetchScalarGridSpec(
            num_scalar_prefetch=0,
            grid=grid,
            in_specs=[
                pl.BlockSpec((tm, D_IN), lambda i: (i, 0)),                         # x tile
                pl.BlockSpec((D_IN, D_HID_PAD), lambda i: (0, 0), **resident),       # W1
                pl.BlockSpec((1, D_HID_PAD), lambda i: (0, 0), **resident),          # b1
                pl.BlockSpec((D_HID_PAD, D_OUT_PAD), lambda i: (0, 0), **resident),  # W2
                pl.BlockSpec((1, D_OUT_PAD), lambda i: (0, 0), **resident),          # b2
            ],
            out_specs=pl.BlockSpec((tm, D_OUT_PAD), lambda i: (i, 0)),
        ),
        compiler_params=pltpu.CompilerParams(
            dimension_semantics=("parallel",),
            vmem_limit_bytes=32 * 1024 * 1024,
        ),
    )(x, w1_p, b1_p, w2_p, b2_p)

    # Strip the lane padding.  Keep this function jitted together with its
    # consumer so this slice fuses instead of becoming a standalone HBM pass.
    return out_padded[:, :D_OUT]


def init_params(key):
    """PyTorch nn.Linear-style init: U[-1/sqrt(fan_in), +1/sqrt(fan_in)]."""
    k1, k2, k3, k4 = jax.random.split(key, 4)
    bound1 = 1.0 / jnp.sqrt(float(D_IN))
    bound2 = 1.0 / jnp.sqrt(float(D_HID))
    w1 = jax.random.uniform(k1, (D_IN, D_HID), jnp.float32, -bound1, bound1)
    b1 = jax.random.uniform(k2, (D_HID,), jnp.float32, -bound1, bound1)
    w2 = jax.random.uniform(k3, (D_HID, D_OUT), jnp.float32, -bound2, bound2)
    b2 = jax.random.uniform(k4, (D_OUT,), jnp.float32, -bound2, bound2)
    return w1, b1, w2, b2


if __name__ == "__main__":
    key = jax.random.PRNGKey(0)
    kx, kx2, kp = jax.random.split(key, 3)

    w1, b1, w2, b2 = init_params(kp)
    params = prepare_params(w1, b1, w2, b2)          # padded/cast once
    fwd = jax.jit(lambda xx: handwritten_detection_forward(xx, params))

    def ref(xx):
        return jax.nn.sigmoid(xx @ w1 + b1[None, :]) @ w2 + b2[None, :]

    # 1) small aligned batch
    B = 8
    x = jax.random.normal(kx, (B, D_IN), jnp.float32)
    out = jax.block_until_ready(fwd(x))
    assert out.shape == (B, D_OUT), out.shape
    err = float(jnp.max(jnp.abs(out - ref(x))))
    assert err < 2e-2, f"mismatch vs reference (aligned batch): max abs err = {err}"

    # 2) ragged batch exercises the partial-last-tile (masked) path
    B2 = 13
    x2 = jax.random.normal(kx2, (B2, D_IN), jnp.float32)
    out2 = jax.block_until_ready(fwd(x2))
    assert out2.shape == (B2, D_OUT), out2.shape
    err2 = float(jnp.max(jnp.abs(out2 - ref(x2))))
    assert err2 < 2e-2, f"mismatch vs reference (ragged batch): max abs err = {err2}"

    print("KERNEL_OK")
</pallas_src>

<mosaic_0001>
module attributes {stable_mosaic.version = 11 : i64} {
  func.func @_mlp_kernel(%arg0: i32, %arg1: memref<8x1024xf32, #tpu.memory_space<vmem>>, %arg2: memref<1024x128xbf16, #tpu.memory_space<vmem>>, %arg3: memref<1x128xf32, #tpu.memory_space<vmem>>, %arg4: memref<128x128xf32, #tpu.memory_space<vmem>>, %arg5: memref<1x128xf32, #tpu.memory_space<vmem>>, %arg6: memref<8x128xf32, #tpu.memory_space<vmem>>) attributes {dimension_semantics = [#tpu.dimension_semantics<parallel>], iteration_bounds = array<i64: 1>, scalar_prefetch = 0 : i64, scratch_operands = 0 : i64, tpu.core_type = #tpu.core_type<tc>, window_params = [{transform_indices = @transform_0, window_bounds = array<i64: 8, 1024>}, {pipeline_mode = #tpu.pipeline_mode<synchronous>, transform_indices = @transform_1, window_bounds = array<i64: 1024, 128>}, {pipeline_mode = #tpu.pipeline_mode<synchronous>, transform_indices = @transform_2, window_bounds = array<i64: 1, 128>}, {pipeline_mode = #tpu.pipeline_mode<synchronous>, transform_indices = @transform_3, window_bounds = array<i64: 128, 128>}, {pipeline_mode = #tpu.pipeline_mode<synchronous>, transform_indices = @transform_4, window_bounds = array<i64: 1, 128>}, {transform_indices = @transform_5, window_bounds = array<i64: 8, 128>}]} {
    %c0 = arith.constant 0 : index
    %c0_0 = arith.constant 0 : index
    %0 = vector.load %arg1[%c0, %c0_0] : memref<8x1024xf32, #tpu.memory_space<vmem>>, vector<8x1024xf32>
    %1 = arith.truncf %0 : vector<8x1024xf32> to vector<8x1024xbf16>
    %c0_1 = arith.constant 0 : index
    %c0_2 = arith.constant 0 : index
    %2 = vector.load %arg2[%c0_1, %c0_2] : memref<1024x128xbf16, #tpu.memory_space<vmem>>, vector<1024x128xbf16>
    %cst = arith.constant dense<0.000000e+00> : vector<8x128xf32>
    %3 = tpu.matmul %1, %2, %cst {dimension_numbers = #tpu.dot_dimension_numbers<[1], [0], [0], [1], [0, 0, 1, 1], [], []>} : vector<8x1024xbf16>, vector<1024x128xbf16>, vector<8x128xf32> -> vector<8x128xf32>
    %c0_3 = arith.constant 0 : index
    %c0_4 = arith.constant 0 : index
    %4 = vector.load %arg3[%c0_3, %c0_4] : memref<1x128xf32, #tpu.memory_space<vmem>>, vector<1x128xf32>
    %5 = vector.broadcast %4 : vector<1x128xf32> to vector<8x128xf32>
    %6 = arith.addf %3, %5 : vector<8x128xf32>
    %7 = arith.negf %6 : vector<8x128xf32>
    %8 = math.exp %7 : vector<8x128xf32>
    %cst_5 = arith.constant 1.000000e+00 : f32
    %9 = vector.broadcast %cst_5 : f32 to vector<8x128xf32>
    %10 = arith.addf %9, %8 : vector<8x128xf32>
    %11 = arith.divf %9, %10 : vector<8x128xf32>
    %c0_6 = arith.constant 0 : index
    %c0_7 = arith.constant 0 : index
    %12 = vector.load %arg4[%c0_6, %c0_7] : memref<128x128xf32, #tpu.memory_space<vmem>>, vector<128x128xf32>
    %cst_8 = arith.constant dense<0.000000e+00> : vector<8x128xf32>
    %13 = tpu.matmul %11, %12, %cst_8 {dimension_numbers = #tpu.dot_dimension_numbers<[1], [0], [0], [1], [0, 0, 1, 1], [], []>} : vector<8x128xf32>, vector<128x128xf32>, vector<8x128xf32> -> vector<8x128xf32>
    %c0_9 = arith.constant 0 : index
    %c0_10 = arith.constant 0 : index
    %14 = vector.load %arg5[%c0_9, %c0_10] : memref<1x128xf32, #tpu.memory_space<vmem>>, vector<1x128xf32>
    %15 = vector.broadcast %14 : vector<1x128xf32> to vector<8x128xf32>
    %16 = arith.addf %13, %15 : vector<8x128xf32>
    %c0_11 = arith.constant 0 : index
    %c0_12 = arith.constant 0 : index
    %17 = vector.load %arg6[%c0_11, %c0_12] : memref<8x128xf32, #tpu.memory_space<vmem>>, vector<8x128xf32>
    tpu.vector_store %arg6[%c0_11, %c0_12], %16 {strides = array<i32>} : memref<8x128xf32, #tpu.memory_space<vmem>>, vector<8x128xf32>,
    return
  }
  func.func @transform_0(%arg0: i32) -> (i32, i32) {
    %c0_i32 = arith.constant 0 : i32
    %c0_i32_0 = arith.constant 0 : i32
    return %arg0, %c0_i32 : i32, i32
  }
  func.func @transform_1(%arg0: i32) -> (i32, i32) {
    %c0_i32 = arith.constant 0 : i32
    %c0_i32_0 = arith.constant 0 : i32
    %c0_i32_1 = arith.constant 0 : i32
    return %c0_i32, %c0_i32_0 : i32, i32
  }
  func.func @transform_2(%arg0: i32) -> (i32, i32) {
    %c0_i32 = arith.constant 0 : i32
    %c0_i32_0 = arith.constant 0 : i32
    %c0_i32_1 = arith.constant 0 : i32
    return %c0_i32, %c0_i32_0 : i32, i32
  }
  func.func @transform_3(%arg0: i32) -> (i32, i32) {
    %c0_i32 = arith.constant 0 : i32
    %c0_i32_0 = arith.constant 0 : i32
    %c0_i32_1 = arith.constant 0 : i32
    return %c0_i32, %c0_i32_0 : i32, i32
  }
  func.func @transform_4(%arg0: i32) -> (i32, i32) {
    %c0_i32 = arith.constant 0 : i32
    %c0_i32_0 = arith.constant 0 : i32
    %c0_i32_1 = arith.constant 0 : i32
    return %c0_i32, %c0_i32_0 : i32, i32
  }
  func.func @transform_5(%arg0: i32) -> (i32, i32) {
    %c0_i32 = arith.constant 0 : i32
    %c0_i32_0 = arith.constant 0 : i32
    return %arg0, %c0_i32 : i32, i32
  }
}

</mosaic_0001>

<llo_original>
// kernel: _lambda_.1
$region0: #{_lambda_.1}
  #allocation0 [shape = 'u32[]', space=smem, size = 0x4, offset = 0x4, fixed_abs, tag = 'smem constant byte address 0x4 - core index']
  #allocation1 [shape = 'u32[144,128]{1,0:T(1,128)}', space=vmem, size = 0x12000, scoped, tag = 'internal scratch']
  %s0 = inlined_call_operand.hbm [shape: f32[8,1024], index: 0, kind: input, shape index: {}]
  %s1 = inlined_call_operand.hbm [shape: bf16[1024,128], index: 1, kind: input, shape index: {}]
  %s2 = inlined_call_operand.vmem [shape: f32[1,128], index: 2, kind: input, shape index: {}]
  %s3 = inlined_call_operand.hbm [shape: f32[128,128], index: 3, kind: input, shape index: {}]
  %s4 = inlined_call_operand.vmem [shape: f32[1,128], index: 4, kind: input, shape index: {}]
  %s5 = inlined_call_operand.hbm [shape: f32[8,128], index: 5, kind: output, shape index: {}]
  %s6 = sld [smem:[#allocation0]]
  $region42: #{_lambda_.1} parent=0
    _
  %s8 = ssub.s32 1, %s6
  %s9 = scalar_select 0, %s8, %s6
  $region1: #{_lambda_.1} parent=0
    #allocation2 [shape = 'u8[32768]{0}', space=vmem, size = 0x8000, scoped, tag = 'input window, operand 0, single buffered']
    #allocation3 [shape = 's32[1]{0}', space=sflag, size = 0x4, scoped, tag = 'scoped memory for _lambda_.1']
    #allocation4 [shape = 's32[1]{0}', space=sflag, size = 0x4, scoped, tag = 'scoped memory for _lambda_.1']
    #allocation5 [shape = 'u8[262144]{0}', space=vmem, size = 0x40000, scoped, tag = 'input window, operand 1, single buffered']
    #allocation6 [shape = 's32[1]{0}', space=sflag, size = 0x4, scoped, tag = 'scoped memory for _lambda_.1']
    #allocation7 [shape = 'u8[65536]{0}', space=vmem, size = 0x10000, scoped, tag = 'input window, operand 3, single buffered']
    #allocation8 [shape = 'u8[4096]{0}', space=vmem, size = 0x1000, scoped, tag = 'output window, operand 0, single buffered']
    %10 = vsyncpa [#allocation3], 0
    %11 = vsyncpa [#allocation6], 0
    %12 = vsyncpa [#allocation4], 0
    // Predicated region
    $region2: #{_lambda_.1} parent=1 // pred_check
      _
    $region3: #{_lambda_.1} parent=1 // pred_check_branch
      %14 = sbr.rel (0) target = $region5
    $region4: #{_lambda_.1} parent=1 // pred_region
      %s16 = ssub.s32 1024, 1024
      %17 = vsyncadd [#allocation3], %s16
      %s19 = sshll.u32 [#allocation2], 4
      %s20 = int_to_ptr.vmem [resolvable:$true] %s19
      %22 = dma.hbm_to_vmem [thread:$0]  %s0, 1024, %s20, [#allocation3]
    $region5: #{_lambda_.1} parent=1 // pred_fallthru
      _
    // Predicated region
    $region6: #{_lambda_.1} parent=1 // pred_check
      _
    $region7: #{_lambda_.1} parent=1 // pred_check_branch
      %24 = sbr.rel (0) target = $region9
    $region8: #{_lambda_.1} parent=1 // pred_region
      %s26 = ssub.s32 8192, 8192
      %27 = vsyncadd [#allocation6], %s26
      %s28 = sshll.u32 [#allocation5], 4
      %s29 = int_to_ptr.vmem [resolvable:$true] %s28
      %34 = dma.hbm_to_vmem [thread:$0]  %s1, 8192, %s29, [#allocation6], 64, 64, 4
    $region9: #{_lambda_.1} parent=1 // pred_fallthru
      _
    // Predicated region
    $region10: #{_lambda_.1} parent=1 // pred_check
      _
    $region11: #{_lambda_.1} parent=1 // pred_check_branch
      %36 = sbr.rel (0) target = $region13
    $region12: #{_lambda_.1} parent=1 // pred_region
      _
    $region13: #{_lambda_.1} parent=1 // pred_fallthru
      _
    // Predicated region
    $region14: #{_lambda_.1} parent=1 // pred_check
      _
    $region15: #{_lambda_.1} parent=1 // pred_check_branch
      %38 = sbr.rel (0) target = $region17
    $region16: #{_lambda_.1} parent=1 // pred_region
      %s40 = ssub.s32 2048, 2048
      %41 = vsyncadd [#allocation6], %s40
      %s42 = sshll.u32 [#allocation7], 4
      %s43 = int_to_ptr.vmem [resolvable:$true] %s42
      %48 = dma.hbm_to_vmem [thread:$0]  %s3, 2048, %s43, [#allocation6], 128, 128, 8
    $region17: #{_lambda_.1} parent=1 // pred_fallthru
      _
    // Predicated region
    $region18: #{_lambda_.1} parent=1 // pred_check
      _
    $region19: #{_lambda_.1} parent=1 // pred_check_branch
      %50 = sbr.rel (0) target = $region21
    $region20: #{_lambda_.1} parent=1 // pred_region
      _
    $region21: #{_lambda_.1} parent=1 // pred_fallthru
      _
    // Predicated region
    $region22: #{_lambda_.1} parent=1 // pred_check
      _
    $region23: #{_lambda_.1} parent=1 // pred_check_branch
      %52 = sbr.rel (0) target = $region25
    $region24: #{_lambda_.1} parent=1 // pred_region
      %53 = dma.done [#allocation3], 1024
    $region25: #{_lambda_.1} parent=1 // pred_fallthru
      _
    // Predicated region
    $region26: #{_lambda_.1} parent=1 // pred_check
      _
    $region27: #{_lambda_.1} parent=1 // pred_check_branch
      %55 = sbr.rel (0) target = $region29
    $region28: #{_lambda_.1} parent=1 // pred_region
      %56 = dma.done [#allocation6], 8192
    $region29: #{_lambda_.1} parent=1 // pred_fallthru
      _
    // Predicated region
    $region30: #{_lambda_.1} parent=1 // pred_check
      _
    $region31: #{_lambda_.1} parent=1 // pred_check_branch
      %58 = sbr.rel (0) target = $region33
    $region32: #{_lambda_.1} parent=1 // pred_region
      %59 = dma.done [#allocation6], 2048
    $region33: #{_lambda_.1} parent=1 // pred_fallthru
      _
    %v61 = vld [vmem:[#allocation2] sm:$0xff]
    %v62 = vld [vmem:[#allocation2 + $0x8] sm:$0xff]
    %v63 = vld [vmem:[#allocation2 + $0x10] sm:$0xff]
    %v64 = vld [vmem:[#allocation2 + $0x18] sm:$0xff]
    %v65 = vld [vmem:[#allocation2 + $0x20] sm:$0xff]
    %v66 = vld [vmem:[#allocation2 + $0x28] sm:$0xff]
    %v67 = vld [vmem:[#allocation2 + $0x30] sm:$0xff]
    %v68 = vld [vmem:[#allocation2 + $0x38] sm:$0xff]
    %v69 = vpack.c.bf16 %v61, %v61
    %v70 = vpack.c.bf16 %v62, %v62
    %v71 = vpack.c.bf16 %v63, %v63
    %v72 = vpack.c.bf16 %v64, %v64
    %v73 = vpack.c.bf16 %v65, %v65
    %v74 = vpack.c.bf16 %v66, %v66
    %v75 = vpack.c.bf16 %v67, %v67
    %v76 = vpack.c.bf16 %v68, %v68
    %v77 = vld [vmem:[#allocation5] sm:$0xf]
    %v78 = vld [vmem:[#allocation5 + $0x4] sm:$0xf]
    %v79 = vld [vmem:[#allocation5 + $0x8] sm:$0xf]
    %v80 = vld [vmem:[#allocation5 + $0xc] sm:$0xf]
    %v81 = vld [vmem:[#allocation5 + $0x10] sm:$0xf]
    %v82 = vld [vmem:[#allocation5 + $0x14] sm:$0xf]
    %v83 = vld [vmem:[#allocation5 + $0x18] sm:$0xf]
    %v84 = vld [vmem:[#allocation5 + $0x1c] sm:$0xf]
    %v85 = vld [vmem:[#allocation5 + $0x20] sm:$0xf]
    %v86 = vld [vmem:[#allocation5 + $0x24] sm:$0xf]
    %v87 = vld [vmem:[#allocation5 + $0x28] sm:$0xf]
    %v88 = vld [vmem:[#allocation5 + $0x2c] sm:$0xf]
    %v89 = vld [vmem:[#allocation5 + $0x30] sm:$0xf]
    %v90 = vld [vmem:[#allocation5 + $0x34] sm:$0xf]
    %v91 = vld [vmem:[#allocation5 + $0x38] sm:$0xf]
    %v92 = vld [vmem:[#allocation5 + $0x3c] sm:$0xf]
    %v93 = vld [vmem:[#allocation5 + $0x40] sm:$0xf]
    %v94 = vld [vmem:[#allocation5 + $0x44] sm:$0xf]
    %v95 = vld [vmem:[#allocation5 + $0x48] sm:$0xf]
    %v96 = vld [vmem:[#allocation5 + $0x4c] sm:$0xf]
    %v97 = vld [vmem:[#allocation5 + $0x50] sm:$0xf]
    %v98 = vld [vmem:[#allocation5 + $0x54] sm:$0xf]
    %v99 = vld [vmem:[#allocation5 + $0x58] sm:$0xf]
    %v100 = vld [vmem:[#allocation5 + $0x5c] sm:$0xf]
    %v101 = vld [vmem:[#allocation5 + $0x60] sm:$0xf]
    %v102 = vld [vmem:[#allocation5 + $0x64] sm:$0xf]
    %v103 = vld [vmem:[#allocation5 + $0x68] sm:$0xf]
    %v104 = vld [vmem:[#allocation5 + $0x6c] sm:$0xf]
    %v105 = vld [vmem:[#allocation5 + $0x70] sm:$0xf]
    %v106 = vld [vmem:[#allocation5 + $0x74] sm:$0xf]
    %v107 = vld [vmem:[#allocation5 + $0x78] sm:$0xf]
    %v108 = vld [vmem:[#allocation5 + $0x7c] sm:$0xf]
    %v109 = vld [vmem:[#allocation5 + $0x80] sm:$0xf]
    %v110 = vld [vmem:[#allocation5 + $0x84] sm:$0xf]
    %v111 = vld [vmem:[#allocation5 + $0x88] sm:$0xf]
    %v112 = vld [vmem:[#allocation5 + $0x8c] sm:$0xf]
    %v113 = vld [vmem:[#allocation5 + $0x90] sm:$0xf]
    %v114 = vld [vmem:[#allocation5 + $0x94] sm:$0xf]
    %v115 = vld [vmem:[#allocation5 + $0x98] sm:$0xf]
    %v116 = vld [vmem:[#allocation5 + $0x9c] sm:$0xf]
    %v117 = vld [vmem:[#allocation5 + $0xa0] sm:$0xf]
    %v118 = vld [vmem:[#allocation5 + $0xa4] sm:$0xf]
    %v119 = vld [vmem:[#allocation5 + $0xa8] sm:$0xf]
    %v120 = vld [vmem:[#allocation5 + $0xac] sm:$0xf]
    %v121 = vld [vmem:[#allocation5 + $0xb0] sm:$0xf]
    %v122 = vld [vmem:[#allocation5 + $0xb4] sm:$0xf]
    %v123 = vld [vmem:[#allocation5 + $0xb8] sm:$0xf]
    %v124 = vld [vmem:[#allocation5 + $0xbc] sm:$0xf]
    %v125 = vld [vmem:[#allocation5 + $0xc0] sm:$0xf]
    %v126 = vld [vmem:[#allocation5 + $0xc4] sm:$0xf]
    %v127 = vld [vmem:[#allocation5 + $0xc8] sm:$0xf]
    %v128 = vld [vmem:[#allocation5 + $0xcc] sm:$0xf]
    %v129 = vld [vmem:[#allocation5 + $0xd0] sm:$0xf]
    %v130 = vld [vmem:[#allocation5 + $0xd4] sm:$0xf]
    %v131 = vld [vmem:[#allocation5 + $0xd8] sm:$0xf]
    %v132 = vld [vmem:[#allocation5 + $0xdc] sm:$0xf]
    %v133 = vld [vmem:[#allocation5 + $0xe0] sm:$0xf]
    %v134 = vld [vmem:[#allocation5 + $0xe4] sm:$0xf]
    %v135 = vld [vmem:[#allocation5 + $0xe8] sm:$0xf]
    %v136 = vld [vmem:[#allocation5 + $0xec] sm:$0xf]
    %v137 = vld [vmem:[#allocation5 + $0xf0] sm:$0xf]
    %v138 = vld [vmem:[#allocation5 + $0xf4] sm:$0xf]
    %v139 = vld [vmem:[#allocation5 + $0xf8] sm:$0xf]
    %v140 = vld [vmem:[#allocation5 + $0xfc] sm:$0xf]
    %v141 = vld [vmem:[#allocation5 + $0x100] sm:$0xf]
    %v142 = vld [vmem:[#allocation5 + $0x104] sm:$0xf]
    %v143 = vld [vmem:[#allocation5 + $0x108] sm:$0xf]
    %v144 = vld [vmem:[#allocation5 + $0x10c] sm:$0xf]
    %v145 = vld [vmem:[#allocation5 + $0x110] sm:$0xf]
    %v146 = vld [vmem:[#allocation5 + $0x114] sm:$0xf]
    %v147 = vld [vmem:[#allocation5 + $0x118] sm:$0xf]
    %v148 = vld [vmem:[#allocation5 + $0x11c] sm:$0xf]
    %v149 = vld [vmem:[#allocation5 + $0x120] sm:$0xf]
    %v150 = vld [vmem:[#allocation5 + $0x124] sm:$0xf]
    %v151 = vld [vmem:[#allocation5 + $0x128] sm:$0xf]
    %v152 = vld [vmem:[#allocation5 + $0x12c] sm:$0xf]
    %v153 = vld [vmem:[#allocation5 + $0x130] sm:$0xf]
    %v154 = vld [vmem:[#allocation5 + $0x134] sm:$0xf]
    %v155 = vld [vmem:[#allocation5 + $0x138] sm:$0xf]
    %v156 = vld [vmem:[#allocation5 + $0x13c] sm:$0xf]
    %v157 = vld [vmem:[#allocation5 + $0x140] sm:$0xf]
    %v158 = vld [vmem:[#allocation5 + $0x144] sm:$0xf]
    %v159 = vld [vmem:[#allocation5 + $0x148] sm:$0xf]
    %v160 = vld [vmem:[#allocation5 + $0x14c] sm:$0xf]
    %v161 = vld [vmem:[#allocation5 + $0x150] sm:$0xf]
    %v162 = vld [vmem:[#allocation5 + $0x154] sm:$0xf]
    %v163 = vld [vmem:[#allocation5 + $0x158] sm:$0xf]
    %v164 = vld [vmem:[#allocation5 + $0x15c] sm:$0xf]
    %v165 = vld [vmem:[#allocation5 + $0x160] sm:$0xf]
    %v166 = vld [vmem:[#allocation5 + $0x164] sm:$0xf]
    %v167 = vld [vmem:[#allocation5 + $0x168] sm:$0xf]
    %v168 = vld [vmem:[#allocation5 + $0x16c] sm:$0xf]
    %v169 = vld [vmem:[#allocation5 + $0x170] sm:$0xf]
    %v170 = vld [vmem:[#allocation5 + $0x174] sm:$0xf]
    %v171 = vld [vmem:[#allocation5 + $0x178] sm:$0xf]
    %v172 = vld [vmem:[#allocation5 + $0x17c] sm:$0xf]
    %v173 = vld [vmem:[#allocation5 + $0x180] sm:$0xf]
    %v174 = vld [vmem:[#allocation5 + $0x184] sm:$0xf]
    %v175 = vld [vmem:[#allocation5 + $0x188] sm:$0xf]
    %v176 = vld [vmem:[#allocation5 + $0x18c] sm:$0xf]
    %v177 = vld [vmem:[#allocation5 + $0x190] sm:$0xf]
    %v178 = vld [vmem:[#allocation5 + $0x194] sm:$0xf]
    %v179 = vld [vmem:[#allocation5 + $0x198] sm:$0xf]
    %v180 = vld [vmem:[#allocation5 + $0x19c] sm:$0xf]
    %v181 = vld [vmem:[#allocation5 + $0x1a0] sm:$0xf]
    %v182 = vld [vmem:[#allocation5 + $0x1a4] sm:$0xf]
    %v183 = vld [vmem:[#allocation5 + $0x1a8] sm:$0xf]
    %v184 = vld [vmem:[#allocation5 + $0x1ac] sm:$0xf]
    %v185 = vld [vmem:[#allocation5 + $0x1b0] sm:$0xf]
    %v186 = vld [vmem:[#allocation5 + $0x1b4] sm:$0xf]
    %v187 = vld [vmem:[#allocation5 + $0x1b8] sm:$0xf]
    %v188 = vld [vmem:[#allocation5 + $0x1bc] sm:$0xf]
    %v189 = vld [vmem:[#allocation5 + $0x1c0] sm:$0xf]
    %v190 = vld [vmem:[#allocation5 + $0x1c4] sm:$0xf]
    %v191 = vld [vmem:[#allocation5 + $0x1c8] sm:$0xf]
    %v192 = vld [vmem:[#allocation5 + $0x1cc] sm:$0xf]
    %v193 = vld [vmem:[#allocation5 + $0x1d0] sm:$0xf]
    %v194 = vld [vmem:[#allocation5 + $0x1d4] sm:$0xf]
    %v195 = vld [vmem:[#allocation5 + $0x1d8] sm:$0xf]
    %v196 = vld [vmem:[#allocation5 + $0x1dc] sm:$0xf]
    %v197 = vld [vmem:[#allocation5 + $0x1e0] sm:$0xf]
    %v198 = vld [vmem:[#allocation5 + $0x1e4] sm:$0xf]
    %v199 = vld [vmem:[#allocation5 + $0x1e8] sm:$0xf]
    %v200 = vld [vmem:[#allocation5 + $0x1ec] sm:$0xf]
    %v201 = vld [vmem:[#allocation5 + $0x1f0] sm:$0xf]
    %v202 = vld [vmem:[#allocation5 + $0x1f4] sm:$0xf]
    %v203 = vld [vmem:[#allocation5 + $0x1f8] sm:$0xf]
    %v204 = vld [vmem:[#allocation5 + $0x1fc] sm:$0xf]
    %v205 = vld [vmem:[%s2] sm:$0x1]
    %v207 = vlaneseq
    %v208 = vshrl.u32 %v207, 7
    %v209 = vsub.s32 0, %v208
    %v210 = vrot.slane %v205, %v209
    %v340 = vunpack.c.l.b16 %v77
    %v341 = vunpack.c.l.b16 %v78
    %v342 = vunpack.c.l.b16 %v79
    %v343 = vunpack.c.l.b16 %v80
    %v344 = vunpack.c.l.b16 %v81
    %v345 = vunpack.c.l.b16 %v82
    %v346 = vunpack.c.l.b16 %v83
    %v347 = vunpack.c.l.b16 %v84
    %v348 = vunpack.c.l.b16 %v85
    %v349 = vunpack.c.l.b16 %v86
    %v350 = vunpack.c.l.b16 %v87
    %v351 = vunpack.c.l.b16 %v88
    %v352 = vunpack.c.l.b16 %v89
    %v353 = vunpack.c.l.b16 %v90
    %v354 = vunpack.c.l.b16 %v91
    %v355 = vunpack.c.l.b16 %v92
    %v356 = vunpack.c.l.b16 %v93
    %v357 = vunpack.c.l.b16 %v94
    %v358 = vunpack.c.l.b16 %v95
    %v359 = vunpack.c.l.b16 %v96
    %v360 = vunpack.c.l.b16 %v97
    %v361 = vunpack.c.l.b16 %v98
    %v362 = vunpack.c.l.b16 %v99
    %v363 = vunpack.c.l.b16 %v100
    %v364 = vunpack.c.l.b16 %v101
    %v365 = vunpack.c.l.b16 %v102
    %v366 = vunpack.c.l.b16 %v103
    %v367 = vunpack.c.l.b16 %v104
    %v368 = vunpack.c.l.b16 %v105
    %v369 = vunpack.c.l.b16 %v106
    %v370 = vunpack.c.l.b16 %v107
    %v371 = vunpack.c.l.b16 %v108
    %v372 = vunpack.c.l.b16 %v109
    %v373 = vunpack.c.l.b16 %v110
    %v374 = vunpack.c.l.b16 %v111
    %v375 = vunpack.c.l.b16 %v112
    %v376 = vunpack.c.l.b16 %v113
    %v377 = vunpack.c.l.b16 %v114
    %v378 = vunpack.c.l.b16 %v115
    %v379 = vunpack.c.l.b16 %v116
    %v380 = vunpack.c.l.b16 %v117
    %v381 = vunpack.c.l.b16 %v118
    %v382 = vunpack.c.l.b16 %v119
    %v383 = vunpack.c.l.b16 %v120
    %v384 = vunpack.c.l.b16 %v121
    %v385 = vunpack.c.l.b16 %v122
    %v386 = vunpack.c.l.b16 %v123
    %v387 = vunpack.c.l.b16 %v124
    %v388 = vunpack.c.l.b16 %v125
    %v389 = vunpack.c.l.b16 %v126
    %v390 = vunpack.c.l.b16 %v127
    %v391 = vunpack.c.l.b16 %v128
    %v392 = vunpack.c.l.b16 %v129
    %v393 = vunpack.c.l.b16 %v130
    %v394 = vunpack.c.l.b16 %v131
    %v395 = vunpack.c.l.b16 %v132
    %v396 = vunpack.c.l.b16 %v133
    %v397 = vunpack.c.l.b16 %v134
    %v398 = vunpack.c.l.b16 %v135
    %v399 = vunpack.c.l.b16 %v136
    %v400 = vunpack.c.l.b16 %v137
    %v401 = vunpack.c.l.b16 %v138
    %v402 = vunpack.c.l.b16 %v139
    %v403 = vunpack.c.l.b16 %v140
    %v404 = vunpack.c.l.b16 %v141
    %v405 = vunpack.c.l.b16 %v142
    %v406 = vunpack.c.l.b16 %v143
    %v407 = vunpack.c.l.b16 %v144
    %v408 = vunpack.c.l.b16 %v145
    %v409 = vunpack.c.l.b16 %v146
    %v410 = vunpack.c.l.b16 %v147
    %v411 = vunpack.c.l.b16 %v148
    %v412 = vunpack.c.l.b16 %v149
    %v413 = vunpack.c.l.b16 %v150
    %v414 = vunpack.c.l.b16 %v151
    %v415 = vunpack.c.l.b16 %v152
    %v416 = vunpack.c.l.b16 %v153
    %v417 = vunpack.c.l.b16 %v154
    %v418 = vunpack.c.l.b16 %v155
    %v419 = vunpack.c.l.b16 %v156
    %v420 = vunpack.c.l.b16 %v157
    %v421 = vunpack.c.l.b16 %v158
    %v422 = vunpack.c.l.b16 %v159
    %v423 = vunpack.c.l.b16 %v160
    %v424 = vunpack.c.l.b16 %v161
    %v425 = vunpack.c.l.b16 %v162
    %v426 = vunpack.c.l.b16 %v163
    %v427 = vunpack.c.l.b16 %v164
    %v428 = vunpack.c.l.b16 %v165
    %v429 = vunpack.c.l.b16 %v166
    %v430 = vunpack.c.l.b16 %v167
    %v431 = vunpack.c.l.b16 %v168
    %v432 = vunpack.c.l.b16 %v169
    %v433 = vunpack.c.l.b16 %v170
    %v434 = vunpack.c.l.b16 %v171
    %v435 = vunpack.c.l.b16 %v172
    %v436 = vunpack.c.l.b16 %v173
    %v437 = vunpack.c.l.b16 %v174
    %v438 = vunpack.c.l.b16 %v175
    %v439 = vunpack.c.l.b16 %v176
    %v440 = vunpack.c.l.b16 %v177
    %v441 = vunpack.c.l.b16 %v178
    %v442 = vunpack.c.l.b16 %v179
    %v443 = vunpack.c.l.b16 %v180
    %v444 = vunpack.c.l.b16 %v181
    %v445 = vunpack.c.l.b16 %v182
    %v446 = vunpack.c.l.b16 %v183
    %v447 = vunpack.c.l.b16 %v184
    %v448 = vunpack.c.l.b16 %v185
    %v449 = vunpack.c.l.b16 %v186
    %v450 = vunpack.c.l.b16 %v187
    %v451 = vunpack.c.l.b16 %v188
    %v452 = vunpack.c.l.b16 %v189
    %v453 = vunpack.c.l.b16 %v190
    %v454 = vunpack.c.l.b16 %v191
    %v455 = vunpack.c.l.b16 %v192
    %v456 = vunpack.c.l.b16 %v193
    %v457 = vunpack.c.l.b16 %v194
    %v458 = vunpack.c.l.b16 %v195
    %v459 = vunpack.c.l.b16 %v196
    %v460 = vunpack.c.l.b16 %v197
    %v461 = vunpack.c.l.b16 %v198
    %v462 = vunpack.c.l.b16 %v199
    %v463 = vunpack.c.l.b16 %v200
    %v464 = vunpack.c.l.b16 %v201
    %v465 = vunpack.c.l.b16 %v202
    %v466 = vunpack.c.l.b16 %v203
    %v467 = vunpack.c.l.b16 %v204
    %v468 = vpack.c.b16 %v341, %v340
    %v469 = vpack.c.b16 %v343, %v342
    %v470 = vpack.c.b16 %v345, %v344
    %v471 = vpack.c.b16 %v347, %v346
    %v472 = vpack.c.b16 %v349, %v348
    %v473 = vpack.c.b16 %v351, %v350
    %v474 = vpack.c.b16 %v353, %v352
    %v475 = vpack.c.b16 %v355, %v354
    %v476 = vpack.c.b16 %v357, %v356
    %v477 = vpack.c.b16 %v359, %v358
    %v478 = vpack.c.b16 %v361, %v360
    %v479 = vpack.c.b16 %v363, %v362
    %v480 = vpack.c.b16 %v365, %v364
    %v481 = vpack.c.b16 %v367, %v366
    %v482 = vpack.c.b16 %v369, %v368
    %v483 = vpack.c.b16 %v371, %v370
    %v484 = vpack.c.b16 %v373, %v372
    %v485 = vpack.c.b16 %v375, %v374
    %v486 = vpack.c.b16 %v377, %v376
    %v487 = vpack.c.b16 %v379, %v378
    %v488 = vpack.c.b16 %v381, %v380
    %v489 = vpack.c.b16 %v383, %v382
    %v490 = vpack.c.b16 %v385, %v384
    %v491 = vpack.c.b16 %v387, %v386
    %v492 = vpack.c.b16 %v389, %v388
    %v493 = vpack.c.b16 %v391, %v390
    %v494 = vpack.c.b16 %v393, %v392
    %v495 = vpack.c.b16 %v395, %v394
    %v496 = vpack.c.b16 %v397, %v396
    %v497 = vpack.c.b16 %v399, %v398
    %v498 = vpack.c.b16 %v401, %v400
    %v499 = vpack.c.b16 %v403, %v402
    %v500 = vpack.c.b16 %v405, %v404
    %v501 = vpack.c.b16 %v407, %v406
    %v502 = vpack.c.b16 %v409, %v408
    %v503 = vpack.c.b16 %v411, %v410
    %v504 = vpack.c.b16 %v413, %v412
    %v505 = vpack.c.b16 %v415, %v414
    %v506 = vpack.c.b16 %v417, %v416
    %v507 = vpack.c.b16 %v419, %v418
    %v508 = vpack.c.b16 %v421, %v420
    %v509 = vpack.c.b16 %v423, %v422
    %v510 = vpack.c.b16 %v425, %v424
    %v511 = vpack.c.b16 %v427, %v426
    %v512 = vpack.c.b16 %v429, %v428
    %v513 = vpack.c.b16 %v431, %v430
    %v514 = vpack.c.b16 %v433, %v432
    %v515 = vpack.c.b16 %v435, %v434
    %v516 = vpack.c.b16 %v437, %v436
    %v517 = vpack.c.b16 %v439, %v438
    %v518 = vpack.c.b16 %v441, %v440
    %v519 = vpack.c.b16 %v443, %v442
    %v520 = vpack.c.b16 %v445, %v444
    %v521 = vpack.c.b16 %v447, %v446
    %v522 = vpack.c.b16 %v449, %v448
    %v523 = vpack.c.b16 %v451, %v450
    %v524 = vpack.c.b16 %v453, %v452
    %v525 = vpack.c.b16 %v455, %v454
    %v526 = vpack.c.b16 %v457, %v456
    %v527 = vpack.c.b16 %v459, %v458
    %v528 = vpack.c.b16 %v461, %v460
    %v529 = vpack.c.b16 %v463, %v462
    %v530 = vpack.c.b16 %v465, %v464
    %v531 = vpack.c.b16 %v467, %v466
    %596 = vmatprep.subr.bf16.mxu0 0
    %597 = vmatpush1.bf16.msra.mxu0 %v475
    %598 = vmatprep.subr.bf16.mxu0 0
    %599 = vmatpush1.bf16.msra.mxu0 %v474
    %600 = vmatprep.subr.bf16.mxu0 0
    %601 = vmatpush1.bf16.msra.mxu0 %v473
    %602 = vmatprep.subr.bf16.mxu0 0
    %603 = vmatpush1.bf16.msra.mxu0 %v472
    %604 = vmatprep.subr.bf16.mxu0 0
    %605 = vmatpush1.bf16.msra.mxu0 %v471
    %606 = vmatprep.subr.bf16.mxu0 0
    %607 = vmatpush1.bf16.msra.mxu0 %v470
    %608 = vmatprep.subr.bf16.mxu0 0
    %609 = vmatpush1.bf16.msra.mxu0 %v469
    %610 = vmatprep.subr.bf16.mxu0 0
    %611 = vmatpush1.bf16.msra.mxu0 %v468
    %612 = vmatprep.subr.bf16.mxu0 0
    %613 = vmatpush2.bf16.msra.mxu0 %v483
    %614 = vmatprep.subr.bf16.mxu0 0
    %615 = vmatpush2.bf16.msra.mxu0 %v482
    %616 = vmatprep.subr.bf16.mxu0 0
    %617 = vmatpush2.bf16.msra.mxu0 %v481
    %618 = vmatprep.subr.bf16.mxu0 0
    %619 = vmatpush2.bf16.msra.mxu0 %v480
    %620 = vmatprep.subr.bf16.mxu0 0
    %621 = vmatpush2.bf16.msra.mxu0 %v479
    %622 = vmatprep.subr.bf16.mxu0 0
    %623 = vmatpush2.bf16.msra.mxu0 %v478
    %624 = vmatprep.subr.bf16.mxu0 0
    %625 = vmatpush2.bf16.msra.mxu0 %v477
    %626 = vmatprep.subr.bf16.mxu0 0
    %627 = vmatpush2.bf16.msra.mxu0 %v476
    %628 = vmatprep.mubr.bf16.mxu0 %v70
    %629 = vmatmul.mubr.bf16.gmra.mxu0 %v69
    %v630 = vpop.f32.mrf.mxu0
    %v631 = vadd.f32 %v210, %v630
    %v632 = vpop.f32.mrf.mxu0
    %v633 = vpop.f32.mrf.mxu0
    %v634 = vpop.f32.mrf.mxu0
    %635 = vdwg.mxu0
    %636 = vmatprep.subr.bf16.mxu0 0
    %637 = vmatpush1.bf16.msra.mxu0 %v491
    %638 = vmatprep.subr.bf16.mxu0 0
    %639 = vmatpush1.bf16.msra.mxu0 %v490
    %640 = vmatprep.subr.bf16.mxu0 0
    %641 = vmatpush1.bf16.msra.mxu0 %v489
    %642 = vmatprep.subr.bf16.mxu0 0
    %643 = vmatpush1.bf16.msra.mxu0 %v488
    %644 = vmatprep.subr.bf16.mxu0 0
    %645 = vmatpush1.bf16.msra.mxu0 %v487
    %646 = vmatprep.subr.bf16.mxu0 0
    %647 = vmatpush1.bf16.msra.mxu0 %v486
    %648 = vmatprep.subr.bf16.mxu0 0
    %649 = vmatpush1.bf16.msra.mxu0 %v485
    %650 = vmatprep.subr.bf16.mxu0 0
    %651 = vmatpush1.bf16.msra.mxu0 %v484
    %652 = vmatprep.subr.bf16.mxu0 0
    %653 = vmatpush2.bf16.msra.mxu0 %v499
    %654 = vmatprep.subr.bf16.mxu0 0
    %655 = vmatpush2.bf16.msra.mxu0 %v498
    %656 = vmatprep.subr.bf16.mxu0 0
    %657 = vmatpush2.bf16.msra.mxu0 %v497
    %658 = vmatprep.subr.bf16.mxu0 0
    %659 = vmatpush2.bf16.msra.mxu0 %v496
    %660 = vmatprep.subr.bf16.mxu0 0
    %661 = vmatpush2.bf16.msra.mxu0 %v495
    %662 = vmatprep.subr.bf16.mxu0 0
    %663 = vmatpush2.bf16.msra.mxu0 %v494
    %664 = vmatprep.subr.bf16.mxu0 0
    %665 = vmatpush2.bf16.msra.mxu0 %v493
    %666 = vmatprep.subr.bf16.mxu0 0
    %667 = vmatpush2.bf16.msra.mxu0 %v492
    %668 = vmatprep.mubr.bf16.mxu0 %v72
    %669 = vmatmul.mubr.bf16.gmra.mxu0 %v71
    %v670 = vpop.f32.mrf.mxu0
    %v671 = vadd.f32 %v631, %v670
    %v672 = vpop.f32.mrf.mxu0
    %v673 = vpop.f32.mrf.mxu0
    %v674 = vpop.f32.mrf.mxu0
    %675 = vdwg.mxu0
    %676 = vmatprep.subr.bf16.mxu0 0
    %677 = vmatpush1.bf16.msra.mxu0 %v507
    %678 = vmatprep.subr.bf16.mxu0 0
    %679 = vmatpush1.bf16.msra.mxu0 %v506
    %680 = vmatprep.subr.bf16.mxu0 0
    %681 = vmatpush1.bf16.msra.mxu0 %v505
    %682 = vmatprep.subr.bf16.mxu0 0
    %683 = vmatpush1.bf16.msra.mxu0 %v504
    %684 = vmatprep.subr.bf16.mxu0 0
    %685 = vmatpush1.bf16.msra.mxu0 %v503
    %686 = vmatprep.subr.bf16.mxu0 0
    %687 = vmatpush1.bf16.msra.mxu0 %v502
    %688 = vmatprep.subr.bf16.mxu0 0
    %689 = vmatpush1.bf16.msra.mxu0 %v501
    %690 = vmatprep.subr.bf16.mxu0 0
    %691 = vmatpush1.bf16.msra.mxu0 %v500
    %692 = vmatprep.subr.bf16.mxu0 0
    %693 = vmatpush2.bf16.msra.mxu0 %v515
    %694 = vmatprep.subr.bf16.mxu0 0
    %695 = vmatpush2.bf16.msra.mxu0 %v514
    %696 = vmatprep.subr.bf16.mxu0 0
    %697 = vmatpush2.bf16.msra.mxu0 %v513
    %698 = vmatprep.subr.bf16.mxu0 0
    %699 = vmatpush2.bf16.msra.mxu0 %v512
    %700 = vmatprep.subr.bf16.mxu0 0
    %701 = vmatpush2.bf16.msra.mxu0 %v511
    %702 = vmatprep.subr.bf16.mxu0 0
    %703 = vmatpush2.bf16.msra.mxu0 %v510
    %704 = vmatprep.subr.bf16.mxu0 0
    %705 = vmatpush2.bf16.msra.mxu0 %v509
    %706 = vmatprep.subr.bf16.mxu0 0
    %707 = vmatpush2.bf16.msra.mxu0 %v508
    %708 = vmatprep.mubr.bf16.mxu0 %v74
    %709 = vmatmul.mubr.bf16.gmra.mxu0 %v73
    %v710 = vpop.f32.mrf.mxu0
    %v711 = vadd.f32 %v671, %v710
    %v712 = vpop.f32.mrf.mxu0
    %v713 = vpop.f32.mrf.mxu0
    %v714 = vpop.f32.mrf.mxu0
    %715 = vdwg.mxu0
    %716 = vmatprep.subr.bf16.mxu0 0
    %717 = vmatpush1.bf16.msra.mxu0 %v523
    %718 = vmatprep.subr.bf16.mxu0 0
    %719 = vmatpush1.bf16.msra.mxu0 %v522
    %720 = vmatprep.subr.bf16.mxu0 0
    %721 = vmatpush1.bf16.msra.mxu0 %v521
    %722 = vmatprep.subr.bf16.mxu0 0
    %723 = vmatpush1.bf16.msra.mxu0 %v520
    %724 = vmatprep.subr.bf16.mxu0 0
    %725 = vmatpush1.bf16.msra.mxu0 %v519
    %726 = vmatprep.subr.bf16.mxu0 0
    %727 = vmatpush1.bf16.msra.mxu0 %v518
    %728 = vmatprep.subr.bf16.mxu0 0
    %729 = vmatpush1.bf16.msra.mxu0 %v517
    %730 = vmatprep.subr.bf16.mxu0 0
    %731 = vmatpush1.bf16.msra.mxu0 %v516
    %732 = vmatprep.subr.bf16.mxu0 0
    %733 = vmatpush2.bf16.msra.mxu0 %v531
    %734 = vmatprep.subr.bf16.mxu0 0
    %735 = vmatpush2.bf16.msra.mxu0 %v530
    %736 = vmatprep.subr.bf16.mxu0 0
    %737 = vmatpush2.bf16.msra.mxu0 %v529
    %738 = vmatprep.subr.bf16.mxu0 0
    %739 = vmatpush2.bf16.msra.mxu0 %v528
    %740 = vmatprep.subr.bf16.mxu0 0
    %741 = vmatpush2.bf16.msra.mxu0 %v527
    %742 = vmatprep.subr.bf16.mxu0 0
    %743 = vmatpush2.bf16.msra.mxu0 %v526
    %744 = vmatprep.subr.bf16.mxu0 0
    %745 = vmatpush2.bf16.msra.mxu0 %v525
    %746 = vmatprep.subr.bf16.mxu0 0
    %747 = vmatpush2.bf16.msra.mxu0 %v524
    %748 = vmatprep.mubr.bf16.mxu0 %v76
    %749 = vmatmul.mubr.bf16.gmra.mxu0 %v75
    %v750 = vpop.f32.mrf.mxu0
    %v751 = vadd.f32 %v711, %v750
    %v752 = vpop.f32.mrf.mxu0
    %v753 = vpop.f32.mrf.mxu0
    %v754 = vpop.f32.mrf.mxu0
    %755 = vdwg.mxu0
    %v756 = vxor.u32 %v751, 2147483648
    %v757 = vmul.f32 %v756, 1.442695
    %v758 = vpow.pop %v757
    %v759 = vadd.f32 %v758, 1.0
    %v760 = vrcp.pop %v759
    %v761 = vmul.f32 1.0, %v760
    %v762 = vld [vmem:[#allocation7] sm:$0xff]
    %v763 = vld [vmem:[#allocation7 + $0x8] sm:$0xff]
    %v764 = vld [vmem:[#allocation7 + $0x10] sm:$0xff]
    %v765 = vld [vmem:[#allocation7 + $0x18] sm:$0xff]
    %v766 = vld [vmem:[#allocation7 + $0x20] sm:$0xff]
    %v767 = vld [vmem:[#allocation7 + $0x28] sm:$0xff]
    %v768 = vld [vmem:[#allocation7 + $0x30] sm:$0xff]
    %v769 = vld [vmem:[#allocation7 + $0x38] sm:$0xff]
    %v770 = vld [vmem:[#allocation7 + $0x40] sm:$0xff]
    %v771 = vld [vmem:[#allocation7 + $0x48] sm:$0xff]
    %v772 = vld [vmem:[#allocation7 + $0x50] sm:$0xff]
    %v773 = vld [vmem:[#allocation7 + $0x58] sm:$0xff]
    %v774 = vld [vmem:[#allocation7 + $0x60] sm:$0xff]
    %v775 = vld [vmem:[#allocation7 + $0x68] sm:$0xff]
    %v776 = vld [vmem:[#allocation7 + $0x70] sm:$0xff]
    %v777 = vld [vmem:[#allocation7 + $0x78] sm:$0xff]
    %v778 = vld [vmem:[%s4] sm:$0x1]
    %v780 = vlaneseq
    %v781 = vshrl.u32 %v780, 7
    %v782 = vsub.s32 0, %v781
    %v783 = vrot.slane %v778, %v782
    %785 = vmatprep.subr.mxu0 0.0
    %786 = vmatpush1.msra.mxu0 %v777
    %787 = vmatprep.subr.mxu0 0.0
    %788 = vmatpush1.msra.mxu0 %v776
    %789 = vmatprep.subr.mxu0 0.0
    %790 = vmatpush1.msra.mxu0 %v775
    %791 = vmatprep.subr.mxu0 0.0
    %792 = vmatpush1.msra.mxu0 %v774
    %793 = vmatprep.subr.mxu0 0.0
    %794 = vmatpush1.msra.mxu0 %v773
    %795 = vmatprep.subr.mxu0 0.0
    %796 = vmatpush1.msra.mxu0 %v772
    %797 = vmatprep.subr.mxu0 0.0
    %798 = vmatpush1.msra.mxu0 %v771
    %799 = vmatprep.subr.mxu0 0.0
    %800 = vmatpush1.msra.mxu0 %v770
    %801 = vmatprep.subr.mxu0 0.0
    %802 = vmatpush1.msra.mxu0 %v769
    %803 = vmatprep.subr.mxu0 0.0
    %804 = vmatpush1.msra.mxu0 %v768
    %805 = vmatprep.subr.mxu0 0.0
    %806 = vmatpush1.msra.mxu0 %v767
    %807 = vmatprep.subr.mxu0 0.0
    %808 = vmatpush1.msra.mxu0 %v766
    %809 = vmatprep.subr.mxu0 0.0
    %810 = vmatpush1.msra.mxu0 %v765
    %811 = vmatprep.subr.mxu0 0.0
    %812 = vmatpush1.msra.mxu0 %v764
    %813 = vmatprep.subr.mxu0 0.0
    %814 = vmatpush1.msra.mxu0 %v763
    %815 = vmatprep.subr.mxu0 0.0
    %816 = vmatpush1.msra.mxu0 %v762
    %817 = vmatprep.subr.mxu0 0.0
    %818 = vmatpush2.msra.mxu0 0.0
    %819 = vmatprep.subr.mxu0 0.0
    %820 = vmatpush2.msra.mxu0 0.0
    %821 = vmatprep.subr.mxu0 0.0
    %822 = vmatpush2.msra.mxu0 0.0
    %823 = vmatprep.subr.mxu0 0.0
    %824 = vmatpush2.msra.mxu0 0.0
    %825 = vmatprep.subr.mxu0 0.0
    %826 = vmatpush2.msra.mxu0 0.0
    %827 = vmatprep.subr.mxu0 0.0
    %828 = vmatpush2.msra.mxu0 0.0
    %829 = vmatprep.subr.mxu0 0.0
    %830 = vmatpush2.msra.mxu0 0.0
    %831 = vmatprep.subr.mxu0 0.0
    %832 = vmatpush2.msra.mxu0 0.0
    %833 = vmatprep.subr.mxu0 0.0
    %834 = vmatpush2.msra.mxu0 0.0
    %835 = vmatprep.subr.mxu0 0.0
    %836 = vmatpush2.msra.mxu0 0.0
    %837 = vmatprep.subr.mxu0 0.0
    %838 = vmatpush2.msra.mxu0 0.0
    %839 = vmatprep.subr.mxu0 0.0
    %840 = vmatpush2.msra.mxu0 0.0
    %841 = vmatprep.subr.mxu0 0.0
    %842 = vmatpush2.msra.mxu0 0.0
    %843 = vmatprep.subr.mxu0 0.0
    %844 = vmatpush2.msra.mxu0 0.0
    %845 = vmatprep.subr.mxu0 0.0
    %846 = vmatpush2.msra.mxu0 0.0
    %847 = vmatprep.subr.mxu0 0.0
    %848 = vmatpush2.msra.mxu0 0.0
    %849 = vmatprep.mubr.f32.mxu0 0.0
    %850 = vmatmul.mubr.f32.gmra.mxu0 %v761
    %v851 = vpop.f32.mrf.mxu0
    %v852 = vadd.f32 %v783, %v851
    %v853 = vpop.f32.mrf.mxu0
    %854 = vdwg.mxu0
    %855 = vst [vmem:[#allocation8] sm:$0xff] %v852
    // Predicated region
    $region34: #{_lambda_.1} parent=1 // pred_check
      _
    $region35: #{_lambda_.1} parent=1 // pred_check_branch
      %857 = sbr.rel (0) target = $region37
    $region36: #{_lambda_.1} parent=1 // pred_region
      %s859 = ssub.s32 128, 128
      %860 = vsyncadd [#allocation4], %s859
      %s862 = sshll.u32 [#allocation8], 4
      %s863 = int_to_ptr.vmem [resolvable:$true] %s862
      %865 = dma.vmem_to_hbm [thread:$0]  %s863, 128, %s5, [#allocation4]
    $region37: #{_lambda_.1} parent=1 // pred_fallthru
      _
    // Predicated region
    $region38: #{_lambda_.1} parent=1 // pred_check
      _
    $region39: #{_lambda_.1} parent=1 // pred_check_branch
      %867 = sbr.rel (0) target = $region41
    $region40: #{_lambda_.1} parent=1 // pred_region
      %868 = dma.done [#allocation4], 128
    $region41: #{_lambda_.1} parent=1 // pred_fallthru
      _
    %869 = vsyncpa [#allocation3], 1
    %870 = vsyncpa [#allocation6], 1
    %871 = vsyncpa [#allocation4], 1

</llo_original>
